<compile_context>
chip_gen: v5e
topology: v5e:2x2
jax: 0.10.0
libtpu: 0.0.40
codegen_flags: <defaults>
</compile_context>

<pallas_src>
import jax
import jax.numpy as jnp
from jax.experimental import pallas as pl
from jax.experimental.pallas import tpu as pltpu


def lens_gnn_lite_kernel(x_ref, a_ref, wfc_ref, bfc_ref,
                         w1_ref, b1_ref, w2_ref, b2_ref, o_ref):
    """One graph per grid step. Refs are 2D (batch dim squeezed).

    x_ref   (N, Fp)  bf16      a_ref (N, N) bf16 (normalized adjacency)
    wfc_ref (Fp, Lp) bf16      bfc_ref (1, Lp) f32
    w1_ref  (Lp, Lp) bf16      b1_ref  (1, Lp) f32
    w2_ref  (Lp, Op) bf16      b2_ref  (1, Op) f32
    o_ref   (N, Op)  f32
    """
    a = a_ref[...]                                           # (N, N) bf16

    # fc + ReLU : bf16 MXU matmul, f32 accumulate, f32 epilogue.
    h = jnp.dot(x_ref[...], wfc_ref[...],
                preferred_element_type=jnp.float32)
    h = jnp.maximum(h + bfc_ref[...], 0.0)                   # (N, Lp) f32

    # GCNConv1: Ahat @ (h @ W1) + b1, then model-level ReLU.
    hw = jnp.dot(h.astype(jnp.bfloat16), w1_ref[...],
                 preferred_element_type=jnp.float32)
    h = jnp.dot(a, hw.astype(jnp.bfloat16),
                preferred_element_type=jnp.float32) + b1_ref[...]
    h = jnp.maximum(h, 0.0)                                  # (N, Lp) f32

    # GCNConv2: Ahat @ (h @ W2) + b2.
    hw = jnp.dot(h.astype(jnp.bfloat16), w2_ref[...],
                 preferred_element_type=jnp.float32)
    h = jnp.dot(a, hw.astype(jnp.bfloat16),
                preferred_element_type=jnp.float32) + b2_ref[...]

    o_ref[...] = h.astype(o_ref.dtype)                       # lane-dense store


def build_normalized_adjacency(edge_index, num_nodes):
    """Dense D^{-1/2}(A+I)D^{-1/2} matching PyG gcn_norm (add_self_loops=True)."""
    src = edge_index[0]
    dst = edge_index[1]
    loop = jnp.arange(num_nodes, dtype=edge_index.dtype)
    src = jnp.concatenate([src, loop])
    dst = jnp.concatenate([dst, loop])
    a = jnp.zeros((num_nodes, num_nodes), jnp.float32).at[dst, src].add(1.0)
    deg = a.sum(axis=1)
    dinv = jnp.where(deg > 0.0, jax.lax.rsqrt(deg), 0.0)
    return dinv[:, None] * a * dinv[None, :]


def _round_up(v, m):
    return (v + m - 1) // m * m


def _pad2(a, rows, cols):
    return jnp.pad(a, ((0, rows - a.shape[0]), (0, cols - a.shape[1])))


def lens_gnn_lite_forward(x, ahat, params):
    """x: (B, N, F) f32, ahat: (B, N, N) f32 -> (B, N, 2*out_dim) f32."""
    B, N, F = x.shape
    L = params["wfc"].shape[1]
    O = params["w2"].shape[1]

    Np = _round_up(N, 8)        # sublane alignment
    Fp = _round_up(F, 128)      # lane-dense matmul K
    Lp = _round_up(L, 128)      # lane-dense latent
    Op = _round_up(O, 128)      # lane-dense output (unmasked vst)

    # bf16 operands (f32 accumulation happens inside the kernel); zero padding
    # of features / weights / Ahat does not change the math.
    xb = jnp.pad(x, ((0, 0), (0, Np - N), (0, Fp - F))).astype(jnp.bfloat16)
    ab = jnp.pad(ahat, ((0, 0), (0, Np - N), (0, Np - N))).astype(jnp.bfloat16)
    wfc = _pad2(params["wfc"], Fp, Lp).astype(jnp.bfloat16)
    w1 = _pad2(params["w1"], Lp, Lp).astype(jnp.bfloat16)
    w2 = _pad2(params["w2"], Lp, Op).astype(jnp.bfloat16)
    bfc = _pad2(params["bfc"], 1, Lp)    # biases stay f32 (epilogue dtype)
    b1 = _pad2(params["b1"], 1, Lp)
    b2 = _pad2(params["b2"], 1, Op)

    out = pl.pallas_call(
        lens_gnn_lite_kernel,
        out_shape=jax.ShapeDtypeStruct((B, Np, Op), jnp.float32),
        grid=(B,),
        in_specs=[
            pl.BlockSpec((None, Np, Fp), lambda b: (b, 0, 0)),   # x  (per graph)
            pl.BlockSpec((None, Np, Np), lambda b: (b, 0, 0)),   # Ahat
            pl.BlockSpec((Fp, Lp), lambda b: (0, 0)),            # wfc (shared)
            pl.BlockSpec((1, Lp), lambda b: (0, 0)),             # bfc
            pl.BlockSpec((Lp, Lp), lambda b: (0, 0)),            # w1
            pl.BlockSpec((1, Lp), lambda b: (0, 0)),             # b1
            pl.BlockSpec((Lp, Op), lambda b: (0, 0)),            # w2
            pl.BlockSpec((1, Op), lambda b: (0, 0)),             # b2
        ],
        out_specs=pl.BlockSpec((None, Np, Op), lambda b: (b, 0, 0)),
        compiler_params=pltpu.CompilerParams(
            dimension_semantics=("parallel",)),
    )(xb, ab, wfc, bfc, w1, b1, w2, b2)

    return out[:, :N, :O]


def lens_gnn_lite_reference(x, ahat, params):
    """Pure-JAX f32 reference of the PyTorch forward."""
    h = jax.nn.relu(x @ params["wfc"] + params["bfc"])
    h = jax.nn.relu(ahat @ (h @ params["w1"]) + params["b1"])
    return ahat @ (h @ params["w2"]) + params["b2"]


def init_params(key, input_dim, out_dim, gnn_latent_dim):
    def glorot(k, shape):
        fan_in, fan_out = shape
        lim = (6.0 / (fan_in + fan_out)) ** 0.5
        return jax.random.uniform(k, shape, jnp.float32, -lim, lim)

    k1, k2, k3, k4, k5, k6 = jax.random.split(key, 6)
    return {
        # nn.Linear(input_dim, L): weight stored pre-transposed -> (in, L)
        "wfc": glorot(k1, (input_dim, gnn_latent_dim)),
        "bfc": 0.1 * jax.random.normal(k4, (1, gnn_latent_dim), jnp.float32),
        # GCNConv(L, L): lin weight pre-transposed -> (L, L)
        "w1": glorot(k2, (gnn_latent_dim, gnn_latent_dim)),
        "b1": 0.1 * jax.random.normal(k5, (1, gnn_latent_dim), jnp.float32),
        # GCNConv(L, 2*out_dim): pre-transposed -> (L, 2*out_dim)
        "w2": glorot(k3, (gnn_latent_dim, 2 * out_dim)),
        "b2": 0.1 * jax.random.normal(k6, (1, 2 * out_dim), jnp.float32),
    }


if __name__ == "__main__":
    key = jax.random.PRNGKey(0)
    kx, ke, kp = jax.random.split(key, 3)

    batch = 4
    num_nodes = 64
    input_dim = 16
    out_dim = 8
    gnn_latent_dim = 32
    num_edges = 256

    x = jax.random.normal(kx, (batch, num_nodes, input_dim), jnp.float32)
    edge_index = jax.random.randint(ke, (batch, 2, num_edges), 0, num_nodes,
                                    dtype=jnp.int32)

    params = init_params(kp, input_dim, out_dim, gnn_latent_dim)
    ahat = jax.vmap(lambda ei: build_normalized_adjacency(ei, num_nodes))(
        edge_index)

    out = lens_gnn_lite_forward(x, ahat, params)
    jax.block_until_ready(out)

    assert out.shape == (batch, num_nodes, 2 * out_dim), out.shape
    assert out.dtype == jnp.float32

    # Loose tolerance: bf16 operands with f32 accumulation vs full-f32 reference.
    ref = lens_gnn_lite_reference(x, ahat, params)
    assert bool(jnp.allclose(out, ref, rtol=0.1, atol=0.1)), (
        float(jnp.max(jnp.abs(out - ref))))

    print("KERNEL_OK")
</pallas_src>

<mosaic_0001>
module attributes {stable_mosaic.version = 11 : i64} {
  func.func @lens_gnn_lite_kernel(%arg0: i32, %arg1: memref<1x64x128xbf16, #tpu.memory_space<vmem>>, %arg2: memref<1x64x64xbf16, #tpu.memory_space<vmem>>, %arg3: memref<128x128xbf16, #tpu.memory_space<vmem>>, %arg4: memref<1x128xf32, #tpu.memory_space<vmem>>, %arg5: memref<128x128xbf16, #tpu.memory_space<vmem>>, %arg6: memref<1x128xf32, #tpu.memory_space<vmem>>, %arg7: memref<128x128xbf16, #tpu.memory_space<vmem>>, %arg8: memref<1x128xf32, #tpu.memory_space<vmem>>, %arg9: memref<1x64x128xf32, #tpu.memory_space<vmem>>) attributes {dimension_semantics = [#tpu.dimension_semantics<parallel>], iteration_bounds = array<i64: 4>, scalar_prefetch = 0 : i64, scratch_operands = 0 : i64, tpu.core_type = #tpu.core_type<tc>, window_params = [{transform_indices = @transform_0, window_bounds = array<i64: 1, 64, 128>}, {transform_indices = @transform_1, window_bounds = array<i64: 1, 64, 64>}, {pipeline_mode = #tpu.pipeline_mode<synchronous>, transform_indices = @transform_2, window_bounds = array<i64: 128, 128>}, {pipeline_mode = #tpu.pipeline_mode<synchronous>, transform_indices = @transform_3, window_bounds = array<i64: 1, 128>}, {pipeline_mode = #tpu.pipeline_mode<synchronous>, transform_indices = @transform_4, window_bounds = array<i64: 128, 128>}, {pipeline_mode = #tpu.pipeline_mode<synchronous>, transform_indices = @transform_5, window_bounds = array<i64: 1, 128>}, {pipeline_mode = #tpu.pipeline_mode<synchronous>, transform_indices = @transform_6, window_bounds = array<i64: 128, 128>}, {pipeline_mode = #tpu.pipeline_mode<synchronous>, transform_indices = @transform_7, window_bounds = array<i64: 1, 128>}, {transform_indices = @transform_8, window_bounds = array<i64: 1, 64, 128>}]} {
    %c0 = arith.constant 0 : index
    %c0_0 = arith.constant 0 : index
    %c0_1 = arith.constant 0 : index
    %0 = vector.load %arg2[%c0, %c0_0, %c0_1] : memref<1x64x64xbf16, #tpu.memory_space<vmem>>, vector<1x64x64xbf16>
    %1 = vector.shape_cast %0 : vector<1x64x64xbf16> to vector<64x64xbf16>
    %c0_2 = arith.constant 0 : index
    %c0_3 = arith.constant 0 : index
    %c0_4 = arith.constant 0 : index
    %2 = vector.load %arg1[%c0_2, %c0_3, %c0_4] : memref<1x64x128xbf16, #tpu.memory_space<vmem>>, vector<1x64x128xbf16>
    %3 = vector.shape_cast %2 : vector<1x64x128xbf16> to vector<64x128xbf16>
    %c0_5 = arith.constant 0 : index
    %c0_6 = arith.constant 0 : index
    %4 = vector.load %arg3[%c0_5, %c0_6] : memref<128x128xbf16, #tpu.memory_space<vmem>>, vector<128x128xbf16>
    %cst = arith.constant dense<0.000000e+00> : vector<64x128xf32>
    %5 = tpu.matmul %3, %4, %cst {dimension_numbers = #tpu.dot_dimension_numbers<[1], [0], [0], [1], [0, 0, 1, 1], [], []>} : vector<64x128xbf16>, vector<128x128xbf16>, vector<64x128xf32> -> vector<64x128xf32>
    %c0_7 = arith.constant 0 : index
    %c0_8 = arith.constant 0 : index
    %6 = vector.load %arg4[%c0_7, %c0_8] : memref<1x128xf32, #tpu.memory_space<vmem>>, vector<1x128xf32>
    %7 = vector.broadcast %6 : vector<1x128xf32> to vector<64x128xf32>
    %8 = arith.addf %5, %7 : vector<64x128xf32>
    %cst_9 = arith.constant 0.000000e+00 : f32
    %9 = vector.broadcast %cst_9 : f32 to vector<64x128xf32>
    %10 = arith.maximumf %8, %9 : vector<64x128xf32>
    %11 = arith.truncf %10 : vector<64x128xf32> to vector<64x128xbf16>
    %c0_10 = arith.constant 0 : index
    %c0_11 = arith.constant 0 : index
    %12 = vector.load %arg5[%c0_10, %c0_11] : memref<128x128xbf16, #tpu.memory_space<vmem>>, vector<128x128xbf16>
    %cst_12 = arith.constant dense<0.000000e+00> : vector<64x128xf32>
    %13 = tpu.matmul %11, %12, %cst_12 {dimension_numbers = #tpu.dot_dimension_numbers<[1], [0], [0], [1], [0, 0, 1, 1], [], []>} : vector<64x128xbf16>, vector<128x128xbf16>, vector<64x128xf32> -> vector<64x128xf32>
    %14 = arith.truncf %13 : vector<64x128xf32> to vector<64x128xbf16>
    %cst_13 = arith.constant dense<0.000000e+00> : vector<64x128xf32>
    %15 = tpu.matmul %1, %14, %cst_13 {dimension_numbers = #tpu.dot_dimension_numbers<[1], [0], [0], [1], [0, 0, 1, 1], [], []>} : vector<64x64xbf16>, vector<64x128xbf16>, vector<64x128xf32> -> vector<64x128xf32>
    %c0_14 = arith.constant 0 : index
    %c0_15 = arith.constant 0 : index
    %16 = vector.load %arg6[%c0_14, %c0_15] : memref<1x128xf32, #tpu.memory_space<vmem>>, vector<1x128xf32>
    %17 = vector.broadcast %16 : vector<1x128xf32> to vector<64x128xf32>
    %18 = arith.addf %15, %17 : vector<64x128xf32>
    %cst_16 = arith.constant 0.000000e+00 : f32
    %19 = vector.broadcast %cst_16 : f32 to vector<64x128xf32>
    %20 = arith.maximumf %18, %19 : vector<64x128xf32>
    %21 = arith.truncf %20 : vector<64x128xf32> to vector<64x128xbf16>
    %c0_17 = arith.constant 0 : index
    %c0_18 = arith.constant 0 : index
    %22 = vector.load %arg7[%c0_17, %c0_18] : memref<128x128xbf16, #tpu.memory_space<vmem>>, vector<128x128xbf16>
    %cst_19 = arith.constant dense<0.000000e+00> : vector<64x128xf32>
    %23 = tpu.matmul %21, %22, %cst_19 {dimension_numbers = #tpu.dot_dimension_numbers<[1], [0], [0], [1], [0, 0, 1, 1], [], []>} : vector<64x128xbf16>, vector<128x128xbf16>, vector<64x128xf32> -> vector<64x128xf32>
    %24 = arith.truncf %23 : vector<64x128xf32> to vector<64x128xbf16>
    %cst_20 = arith.constant dense<0.000000e+00> : vector<64x128xf32>
    %25 = tpu.matmul %1, %24, %cst_20 {dimension_numbers = #tpu.dot_dimension_numbers<[1], [0], [0], [1], [0, 0, 1, 1], [], []>} : vector<64x64xbf16>, vector<64x128xbf16>, vector<64x128xf32> -> vector<64x128xf32>
    %c0_21 = arith.constant 0 : index
    %c0_22 = arith.constant 0 : index
    %26 = vector.load %arg8[%c0_21, %c0_22] : memref<1x128xf32, #tpu.memory_space<vmem>>, vector<1x128xf32>
    %27 = vector.broadcast %26 : vector<1x128xf32> to vector<64x128xf32>
    %28 = arith.addf %25, %27 : vector<64x128xf32>
    %c0_23 = arith.constant 0 : index
    %c0_24 = arith.constant 0 : index
    %c0_25 = arith.constant 0 : index
    %29 = vector.load %arg9[%c0_23, %c0_24, %c0_25] : memref<1x64x128xf32, #tpu.memory_space<vmem>>, vector<1x64x128xf32>
    %30 = vector.shape_cast %29 : vector<1x64x128xf32> to vector<64x128xf32>
    %31 = vector.shape_cast %28 : vector<64x128xf32> to vector<1x64x128xf32>
    tpu.vector_store %arg9[%c0_23, %c0_24, %c0_25], %31 {strides = array<i32>} : memref<1x64x128xf32, #tpu.memory_space<vmem>>, vector<1x64x128xf32>,
    return
  }
  func.func @transform_0(%arg0: i32) -> (i32, i32, i32) {
    %c0_i32 = arith.constant 0 : i32
    %c0_i32_0 = arith.constant 0 : i32
    %c0_i32_1 = arith.constant 0 : i32
    return %arg0, %c0_i32, %c0_i32_0 : i32, i32, i32
  }
  func.func @transform_1(%arg0: i32) -> (i32, i32, i32) {
    %c0_i32 = arith.constant 0 : i32
    %c0_i32_0 = arith.constant 0 : i32
    %c0_i32_1 = arith.constant 0 : i32
    return %arg0, %c0_i32, %c0_i32_0 : i32, i32, i32
  }
  func.func @transform_2(%arg0: i32) -> (i32, i32) {
    %c0_i32 = arith.constant 0 : i32
    %c0_i32_0 = arith.constant 0 : i32
    %c0_i32_1 = arith.constant 0 : i32
    return %c0_i32, %c0_i32_0 : i32, i32
  }
  func.func @transform_3(%arg0: i32) -> (i32, i32) {
    %c0_i32 = arith.constant 0 : i32
    %c0_i32_0 = arith.constant 0 : i32
    %c0_i32_1 = arith.constant 0 : i32
    return %c0_i32, %c0_i32_0 : i32, i32
  }
  func.func @transform_4(%arg0: i32) -> (i32, i32) {
    %c0_i32 = arith.constant 0 : i32
    %c0_i32_0 = arith.constant 0 : i32
    %c0_i32_1 = arith.constant 0 : i32
    return %c0_i32, %c0_i32_0 : i32, i32
  }
  func.func @transform_5(%arg0: i32) -> (i32, i32) {
    %c0_i32 = arith.constant 0 : i32
    %c0_i32_0 = arith.constant 0 : i32
    %c0_i32_1 = arith.constant 0 : i32
    return %c0_i32, %c0_i32_0 : i32, i32
  }
  func.func @transform_6(%arg0: i32) -> (i32, i32) {
    %c0_i32 = arith.constant 0 : i32
    %c0_i32_0 = arith.constant 0 : i32
    %c0_i32_1 = arith.constant 0 : i32
    return %c0_i32, %c0_i32_0 : i32, i32
  }
  func.func @transform_7(%arg0: i32) -> (i32, i32) {
    %c0_i32 = arith.constant 0 : i32
    %c0_i32_0 = arith.constant 0 : i32
    %c0_i32_1 = arith.constant 0 : i32
    return %c0_i32, %c0_i32_0 : i32, i32
  }
  func.func @transform_8(%arg0: i32) -> (i32, i32, i32) {
    %c0_i32 = arith.constant 0 : i32
    %c0_i32_0 = arith.constant 0 : i32
    %c0_i32_1 = arith.constant 0 : i32
    return %arg0, %c0_i32, %c0_i32_0 : i32, i32, i32
  }
}

</mosaic_0001>

<llo_original>
// kernel: tpu_custom_call.1
$region0: #{tpu_custom_call.1}
  #allocation0 [shape = 'u32[]', space=smem, size = 0x4, offset = 0x4, fixed_abs, tag = 'smem constant byte address 0x4 - core index']
  #allocation1 [shape = 'u32[72,128]{1,0:T(1,128)}', space=vmem, size = 0x9000, scoped, tag = 'internal scratch']
  %s0 = inlined_call_operand.hbm [shape: bf16[4,64,128], index: 0, kind: input, shape index: {}]
  %s1 = inlined_call_operand.hbm [shape: bf16[4,64,64], index: 1, kind: input, shape index: {}]
  %s2 = inlined_call_operand.hbm [shape: bf16[128,128], index: 2, kind: input, shape index: {}]
  %s3 = inlined_call_operand.vmem [shape: f32[1,128], index: 3, kind: input, shape index: {}]
  %s4 = inlined_call_operand.hbm [shape: bf16[128,128], index: 4, kind: input, shape index: {}]
  %s5 = inlined_call_operand.vmem [shape: f32[1,128], index: 5, kind: input, shape index: {}]
  %s6 = inlined_call_operand.hbm [shape: bf16[128,128], index: 6, kind: input, shape index: {}]
  %s7 = inlined_call_operand.vmem [shape: f32[1,128], index: 7, kind: input, shape index: {}]
  %s8 = inlined_call_operand.hbm [shape: f32[4,64,128], index: 8, kind: output, shape index: {}]
  %s9 = sld [smem:[#allocation0]]
  $region85: #{tpu_custom_call.1} parent=0
    _
  %s11 = ssub.s32 1, %s9
  %s12 = scalar_select 0, %s11, %s9
  $region1: #{tpu_custom_call.1} parent=0
    #allocation2 [shape = 'u8[32768]{0}', space=vmem, size = 0x8000, scoped, tag = 'input window, operand 0']
    #allocation3 [shape = 's32[2]{0}', space=sflag, size = 0x8, scoped, tag = 'scoped memory for tpu_custom_call.1']
    #allocation4 [shape = 's32[2]{0}', space=sflag, size = 0x8, scoped, tag = 'scoped memory for tpu_custom_call.1']
    #allocation5 [shape = 'u8[32768]{0}', space=vmem, size = 0x8000, scoped, tag = 'input window, operand 1']
    #allocation6 [shape = 's32[2]{0}', space=sflag, size = 0x8, scoped, tag = 'scoped memory for tpu_custom_call.1']
    #allocation7 [shape = 'u8[32768]{0}', space=vmem, size = 0x8000, scoped, tag = 'input window, operand 2, single buffered']
    #allocation8 [shape = 'u8[32768]{0}', space=vmem, size = 0x8000, scoped, tag = 'input window, operand 4, single buffered']
    #allocation9 [shape = 's32[1]{0}', space=sflag, size = 0x4, scoped, tag = 'scoped memory for tpu_custom_call.1']
    #allocation10 [shape = 'u8[32768]{0}', space=vmem, size = 0x8000, scoped, tag = 'input window, operand 6, single buffered']
    #allocation11 [shape = 'u8[65536]{0}', space=vmem, size = 0x10000, scoped, tag = 'output window, operand 0']
    %13 = vsyncpa [#allocation3], 0
    %s14 = scalar_lea.sflag [#allocation3], 1
    %15 = vsyncpa %s14, 0
    %16 = vsyncpa [#allocation6], 0
    %s17 = scalar_lea.sflag [#allocation6], 1
    %18 = vsyncpa %s17, 0
    %19 = vsyncpa [#allocation9], 0
    %20 = vsyncpa [#allocation4], 0
    %s21 = scalar_lea.sflag [#allocation4], 1
    %22 = vsyncpa %s21, 0
    loop: start=0, step=1, limit=6
    $region2: #{tpu_custom_call.1} parent=1 // loop_pre_header
      _
    $region3: #{tpu_custom_call.1} parent=1 // loop_header
      %s24 = sphi 0, %s28
      %p25 = scmp.ge.s32.totalorder %s24, 6
      %s34 = sphi 0, %s36
      %s37 = sphi 0, %s34
      %s38 = sphi 0, %s37
      %s54 = sphi 0, %s38
      %s60 = sphi 0, %s62
      %s63 = sphi 0, %s60
      %s64 = sphi 0, %s63
      %s80 = sphi 0, %s64
      %s84 = sphi 0, %s84
      %s86 = sphi 0, %s84
      %s87 = sphi 0, %s86
      %s101 = sphi 0, %s87
      %s105 = sphi 0, %s105
      %s107 = sphi 0, %s105
      %s108 = sphi 0, %s107
      %s122 = sphi 0, %s108
      %s126 = sphi 0, %s126
      %s128 = sphi 0, %s126
      %s129 = sphi 0, %s128
      %s143 = sphi 0, %s129
      %s147 = sphi 0, %s147
      %s149 = sphi 0, %s147
      %s150 = sphi 0, %s149
      %s164 = sphi 0, %s150
      %s168 = sphi 0, %s168
      %s170 = sphi 0, %s168
      %s171 = sphi 0, %s170
      %s185 = sphi 0, %s171
      %s189 = sphi 0, %s189
      %s191 = sphi 0, %s189
      %s192 = sphi 0, %s191
      %s206 = sphi 0, %s192
      %s212 = sphi 0, %s214
      %s215 = sphi 0, %s212
      %s216 = sphi 0, %s215
      %s232 = sphi 0, %s216
    $region4: #{tpu_custom_call.1} parent=1 // loop_header_branch
      %27 = sbr.rel (%p25) target = $region8
    $region5: #{tpu_custom_call.1} parent=1 // loop_body
      %s29 = ssub.s32 %s24, 1
      %s30 = ssub.s32 %s24, 2
      %s31 = sadd.s32 %s24, 1
      %s32 = ssub.s32 %s24, %s31
      %p33 = scmp.eq.s32.totalorder %s32, 0
      %s35 = sadd.s32 %s34, 1
      %s36 = scalar_select %p33, %s34, %s35
      %p39 = pneg %p33
      %p40 = scmp.eq.s32.totalorder %s24, 3
      %p41 = por %p39, %p40
      %p42 = scmp.ne.s32.totalorder %s34, %s37
      %p43 = scmp.eq.s32.totalorder %s24, 0
      %p44 = por %p42, %p43
      %p45 = scmp.ne.s32.totalorder %s34, %s37
      %p46 = scmp.eq.s32.totalorder %s29, 3
      %p47 = por %p45, %p46
      %p48 = scmp.ne.s32.totalorder %s37, %s38
      %p49 = scmp.eq.s32.totalorder %s29, 0
      %p50 = por %p48, %p49
      %p51 = scmp.ne.s32.totalorder %s37, %s38
      %p52 = scmp.eq.s32.totalorder %s30, 3
      %p53 = por %p51, %p52
      %p55 = scmp.ne.s32.totalorder %s38, %s54
      %p56 = scmp.eq.s32.totalorder %s30, 0
      %p57 = por %p55, %p56
      %s58 = ssub.s32 %s24, %s31
      %p59 = scmp.eq.s32.totalorder %s58, 0
      %s61 = sadd.s32 %s60, 1
      %s62 = scalar_select %p59, %s60, %s61
      %p65 = pneg %p59
      %p66 = scmp.eq.s32.totalorder %s24, 3
      %p67 = por %p65, %p66
      %p68 = scmp.ne.s32.totalorder %s60, %s63
      %p69 = scmp.eq.s32.totalorder %s24, 0
      %p70 = por %p68, %p69
      %p71 = scmp.ne.s32.totalorder %s60, %s63
      %p72 = scmp.eq.s32.totalorder %s29, 3
      %p73 = por %p71, %p72
      %p74 = scmp.ne.s32.totalorder %s63, %s64
      %p75 = scmp.eq.s32.totalorder %s29, 0
      %p76 = por %p74, %p75
      %p77 = scmp.ne.s32.totalorder %s63, %s64
      %p78 = scmp.eq.s32.totalorder %s30, 3
      %p79 = por %p77, %p78
      %p81 = scmp.ne.s32.totalorder %s64, %s80
      %p82 = scmp.eq.s32.totalorder %s30, 0
      %p83 = por %p81, %p82
      %s85 = sadd.s32 %s84, 1
      %p88 = scmp.eq.s32.totalorder %s24, 3
      %p89 = scmp.ne.s32.totalorder %s84, %s86
      %p90 = scmp.eq.s32.totalorder %s24, 0
      %p91 = por %p89, %p90
      %p92 = scmp.ne.s32.totalorder %s84, %s86
      %p93 = scmp.eq.s32.totalorder %s29, 3
      %p94 = por %p92, %p93
      %p95 = scmp.ne.s32.totalorder %s86, %s87
      %p96 = scmp.eq.s32.totalorder %s29, 0
      %p97 = por %p95, %p96
      %p98 = scmp.ne.s32.totalorder %s86, %s87
      %p99 = scmp.eq.s32.totalorder %s30, 3
      %p100 = por %p98, %p99
      %p102 = scmp.ne.s32.totalorder %s87, %s101
      %p103 = scmp.eq.s32.totalorder %s30, 0
      %p104 = por %p102, %p103
      %s106 = sadd.s32 %s105, 1
      %p109 = scmp.eq.s32.totalorder %s24, 3
      %p110 = scmp.ne.s32.totalorder %s105, %s107
      %p111 = scmp.eq.s32.totalorder %s24, 0
      %p112 = por %p110, %p111
      %p113 = scmp.ne.s32.totalorder %s105, %s107
      %p114 = scmp.eq.s32.totalorder %s29, 3
      %p115 = por %p113, %p114
      %p116 = scmp.ne.s32.totalorder %s107, %s108
      %p117 = scmp.eq.s32.totalorder %s29, 0
      %p118 = por %p116, %p117
      %p119 = scmp.ne.s32.totalorder %s107, %s108
      %p120 = scmp.eq.s32.totalorder %s30, 3
      %p121 = por %p119, %p120
      %p123 = scmp.ne.s32.totalorder %s108, %s122
      %p124 = scmp.eq.s32.totalorder %s30, 0
      %p125 = por %p123, %p124
      %s127 = sadd.s32 %s126, 1
      %p130 = scmp.eq.s32.totalorder %s24, 3
      %p131 = scmp.ne.s32.totalorder %s126, %s128
      %p132 = scmp.eq.s32.totalorder %s24, 0
      %p133 = por %p131, %p132
      %p134 = scmp.ne.s32.totalorder %s126, %s128
      %p135 = scmp.eq.s32.totalorder %s29, 3
      %p136 = por %p134, %p135
      %p137 = scmp.ne.s32.totalorder %s128, %s129
      %p138 = scmp.eq.s32.totalorder %s29, 0
      %p139 = por %p137, %p138
      %p140 = scmp.ne.s32.totalorder %s128, %s129
      %p141 = scmp.eq.s32.totalorder %s30, 3
      %p142 = por %p140, %p141
      %p144 = scmp.ne.s32.totalorder %s129, %s143
      %p145 = scmp.eq.s32.totalorder %s30, 0
      %p146 = por %p144, %p145
      %s148 = sadd.s32 %s147, 1
      %p151 = scmp.eq.s32.totalorder %s24, 3
      %p152 = scmp.ne.s32.totalorder %s147, %s149
      %p153 = scmp.eq.s32.totalorder %s24, 0
      %p154 = por %p152, %p153
      %p155 = scmp.ne.s32.totalorder %s147, %s149
      %p156 = scmp.eq.s32.totalorder %s29, 3
      %p157 = por %p155, %p156
      %p158 = scmp.ne.s32.totalorder %s149, %s150
      %p159 = scmp.eq.s32.totalorder %s29, 0
      %p160 = por %p158, %p159
      %p161 = scmp.ne.s32.totalorder %s149, %s150
      %p162 = scmp.eq.s32.totalorder %s30, 3
      %p163 = por %p161, %p162
      %p165 = scmp.ne.s32.totalorder %s150, %s164
      %p166 = scmp.eq.s32.totalorder %s30, 0
      %p167 = por %p165, %p166
      %s169 = sadd.s32 %s168, 1
      %p172 = scmp.eq.s32.totalorder %s24, 3
      %p173 = scmp.ne.s32.totalorder %s168, %s170
      %p174 = scmp.eq.s32.totalorder %s24, 0
      %p175 = por %p173, %p174
      %p176 = scmp.ne.s32.totalorder %s168, %s170
      %p177 = scmp.eq.s32.totalorder %s29, 3
      %p178 = por %p176, %p177
      %p179 = scmp.ne.s32.totalorder %s170, %s171
      %p180 = scmp.eq.s32.totalorder %s29, 0
      %p181 = por %p179, %p180
      %p182 = scmp.ne.s32.totalorder %s170, %s171
      %p183 = scmp.eq.s32.totalorder %s30, 3
      %p184 = por %p182, %p183
      %p186 = scmp.ne.s32.totalorder %s171, %s185
      %p187 = scmp.eq.s32.totalorder %s30, 0
      %p188 = por %p186, %p187
      %s190 = sadd.s32 %s189, 1
      %p193 = scmp.eq.s32.totalorder %s24, 3
      %p194 = scmp.ne.s32.totalorder %s189, %s191
      %p195 = scmp.eq.s32.totalorder %s24, 0
      %p196 = por %p194, %p195
      %p197 = scmp.ne.s32.totalorder %s189, %s191
      %p198 = scmp.eq.s32.totalorder %s29, 3
      %p199 = por %p197, %p198
      %p200 = scmp.ne.s32.totalorder %s191, %s192
      %p201 = scmp.eq.s32.totalorder %s29, 0
      %p202 = por %p200, %p201
      %p203 = scmp.ne.s32.totalorder %s191, %s192
      %p204 = scmp.eq.s32.totalorder %s30, 3
      %p205 = por %p203, %p204
      %p207 = scmp.ne.s32.totalorder %s192, %s206
      %p208 = scmp.eq.s32.totalorder %s30, 0
      %p209 = por %p207, %p208
      %s210 = ssub.s32 %s24, %s31
      %p211 = scmp.eq.s32.totalorder %s210, 0
      %s213 = sadd.s32 %s212, 1
      %s214 = scalar_select %p211, %s212, %s213
      %p217 = pneg %p211
      %p218 = scmp.eq.s32.totalorder %s24, 3
      %p219 = por %p217, %p218
      %p220 = scmp.ne.s32.totalorder %s212, %s215
      %p221 = scmp.eq.s32.totalorder %s24, 0
      %p222 = por %p220, %p221
      %p223 = scmp.ne.s32.totalorder %s212, %s215
      %p224 = scmp.eq.s32.totalorder %s29, 3
      %p225 = por %p223, %p224
      %p226 = scmp.ne.s32.totalorder %s215, %s216
      %p227 = scmp.eq.s32.totalorder %s29, 0
      %p228 = por %p226, %p227
      %p229 = scmp.ne.s32.totalorder %s215, %s216
      %p230 = scmp.eq.s32.totalorder %s30, 3
      %p231 = por %p229, %p230
      %p233 = scmp.ne.s32.totalorder %s216, %s232
      %p234 = scmp.eq.s32.totalorder %s30, 0
      %p235 = por %p233, %p234
      %p236 = scmp.le.s32.totalorder 1, %s24
      %p237 = scmp.lt.s32.totalorder %s24, 5
      %p238 = pnand %p236, %p237
      %p239 = pneg %p238
      // Predicated region
      $region9: #{tpu_custom_call.1} parent=5 // pred_check
        _
      $region10: #{tpu_custom_call.1} parent=5 // pred_check_branch
        %241 = sbr.rel (%p238) target = $region12
      $region11: #{tpu_custom_call.1} parent=5 // pred_region
        %s242 = ssub.s32 %s24, 1
        // Predicated region
        $region13: #{tpu_custom_call.1} parent=11 // pred_check
          %p243 = pneg %p97
        $region14: #{tpu_custom_call.1} parent=11 // pred_check_branch
          %245 = sbr.rel (%p243) target = $region16
        $region15: #{tpu_custom_call.1} parent=11 // pred_region
          %247 = vsyncadd [#allocation6], 0
          %s248 = sshll.u32 %s2, 4
          %s249 = int_to_ptr.hbm [resolvable:$true] %s248
          %s250 = sshll.u32 [#allocation7], 4
          %s251 = int_to_ptr.vmem [resolvable:$true] %s250
          %256 = dma.hbm_to_vmem [thread:$0]  %s249, 1024, %s251, [#allocation6], 64, 64, 4
        $region16: #{tpu_custom_call.1} parent=11 // pred_fallthru
          _
        // Predicated region
        $region17: #{tpu_custom_call.1} parent=11 // pred_check
          %p257 = pneg %p118
        $region18: #{tpu_custom_call.1} parent=11 // pred_check_branch
          %259 = sbr.rel (%p257) target = $region20
        $region19: #{tpu_custom_call.1} parent=11 // pred_region
          _
        $region20: #{tpu_custom_call.1} parent=11 // pred_fallthru
          _
        // Predicated region
        $region21: #{tpu_custom_call.1} parent=11 // pred_check
          %p260 = pneg %p139
        $region22: #{tpu_custom_call.1} parent=11 // pred_check_branch
          %262 = sbr.rel (%p260) target = $region24
        $region23: #{tpu_custom_call.1} parent=11 // pred_region
          %264 = vsyncadd [#allocation9], 0
          %s265 = sshll.u32 %s4, 4
          %s266 = int_to_ptr.hbm [resolvable:$true] %s265
          %s267 = sshll.u32 [#allocation8], 4
          %s268 = int_to_ptr.vmem [resolvable:$true] %s267
          %273 = dma.hbm_to_vmem [thread:$0]  %s266, 1024, %s268, [#allocation9], 64, 64, 4
        $region24: #{tpu_custom_call.1} parent=11 // pred_fallthru
          _
        // Predicated region
        $region25: #{tpu_custom_call.1} parent=11 // pred_check
          %p274 = pneg %p160
        $region26: #{tpu_custom_call.1} parent=11 // pred_check_branch
          %276 = sbr.rel (%p274) target = $region28
        $region27: #{tpu_custom_call.1} parent=11 // pred_region
          _
        $region28: #{tpu_custom_call.1} parent=11 // pred_fallthru
          _
        // Predicated region
        $region29: #{tpu_custom_call.1} parent=11 // pred_check
          %p277 = pneg %p181
        $region30: #{tpu_custom_call.1} parent=11 // pred_check_branch
          %279 = sbr.rel (%p277) target = $region32
        $region31: #{tpu_custom_call.1} parent=11 // pred_region
          %281 = vsyncadd [#allocation9], 0
          %s282 = sshll.u32 %s6, 4
          %s283 = int_to_ptr.hbm [resolvable:$true] %s282
          %s284 = sshll.u32 [#allocation10], 4
          %s285 = int_to_ptr.vmem [resolvable:$true] %s284
          %290 = dma.hbm_to_vmem [thread:$0]  %s283, 1024, %s285, [#allocation9], 64, 64, 4
        $region32: #{tpu_custom_call.1} parent=11 // pred_fallthru
          _
        // Predicated region
        $region33: #{tpu_custom_call.1} parent=11 // pred_check
          %p291 = pneg %p202
        $region34: #{tpu_custom_call.1} parent=11 // pred_check_branch
          %293 = sbr.rel (%p291) target = $region36
        $region35: #{tpu_custom_call.1} parent=11 // pred_region
          _
        $region36: #{tpu_custom_call.1} parent=11 // pred_fallthru
          _
      $region12: #{tpu_custom_call.1} parent=5 // pred_fallthru
        _
      %p294 = scmp.lt.s32.totalorder %s24, 4
      // Predicated region
      $region37: #{tpu_custom_call.1} parent=5 // pred_check
        %p295 = pneg %p294
      $region38: #{tpu_custom_call.1} parent=5 // pred_check_branch
        %297 = sbr.rel (%p295) target = $region40
      $region39: #{tpu_custom_call.1} parent=5 // pred_region
        // Predicated region
        $region41: #{tpu_custom_call.1} parent=39 // pred_check
          %p298 = pneg %p44
        $region42: #{tpu_custom_call.1} parent=39 // pred_check_branch
          %300 = sbr.rel (%p298) target = $region44
        $region43: #{tpu_custom_call.1} parent=39 // pred_region
          %s301 = sand.u32 %s34, 1
          %s302 = scalar_lea.sflag [#allocation3], %s301
          %s303 = sand.u32 %s34, 1
          %s304 = smul.addr %s303, 32
          %s305 = scalar_lea.vmem [#allocation2], %s304
          %307 = vsyncadd %s302, 0
          %s308 = smul.addr %s24, 8
          %s309 = smul.addr %s308, 4
          %s310 = scalar_lea.hbm %s0, %s309
          %s311 = sshll.u32 %s310, 4
          %s312 = int_to_ptr.hbm [resolvable:$true] %s311
          %s313 = sshll.u32 %s305, 4
          %s314 = int_to_ptr.vmem [resolvable:$true] %s313
          %319 = dma.hbm_to_vmem [thread:$0]  %s312, 512, %s314, %s302, 64, 64, 4
        $region44: #{tpu_custom_call.1} parent=39 // pred_fallthru
          _
        // Predicated region
        $region45: #{tpu_custom_call.1} parent=39 // pred_check
          %p320 = pneg %p70
        $region46: #{tpu_custom_call.1} parent=39 // pred_check_branch
          %322 = sbr.rel (%p320) target = $region48
        $region47: #{tpu_custom_call.1} parent=39 // pred_region
          %s323 = sand.u32 %s24, 1
          %s324 = scalar_lea.sflag [#allocation6], %s323
          %s325 = sand.u32 %s60, 1
          %s326 = smul.addr %s325, 32
          %s327 = scalar_lea.vmem [#allocation5], %s326
          %329 = vsyncadd %s324, 0
          %s330 = smul.addr %s24, 8
          %s331 = smul.addr %s330, 4
          %s332 = scalar_lea.hbm %s1, %s331
          %s333 = sshll.u32 %s332, 4
          %s334 = int_to_ptr.hbm [resolvable:$true] %s333
          %s335 = sshll.u32 %s327, 4
          %s336 = int_to_ptr.vmem [resolvable:$true] %s335
          %341 = dma.hbm_to_vmem [thread:$0]  %s334, 512, %s336, %s324, 64, 64, 4
        $region48: #{tpu_custom_call.1} parent=39 // pred_fallthru
          _
      $region40: #{tpu_custom_call.1} parent=5 // pred_fallthru
        _
      %p342 = scmp.le.s32.totalorder 1, %s24
      %p343 = scmp.lt.s32.totalorder %s24, 5
      %p344 = pnand %p342, %p343
      %p345 = pneg %p344
      // Predicated region
      $region49: #{tpu_custom_call.1} parent=5 // pred_check
        _
      $region50: #{tpu_custom_call.1} parent=5 // pred_check_branch
        %347 = sbr.rel (%p344) target = $region52
      $region51: #{tpu_custom_call.1} parent=5 // pred_region
        %s348 = ssub.s32 %s24, 1
        %s349 = sand.u32 %s37, 1
        %s350 = scalar_lea.sflag [#allocation3], %s349
        %s351 = sand.u32 %s37, 1
        %s352 = smul.addr %s351, 32
        %s353 = scalar_lea.vmem [#allocation2], %s352
        // Predicated region
        $region53: #{tpu_custom_call.1} parent=51 // pred_check
          %p354 = pneg %p50
        $region54: #{tpu_custom_call.1} parent=51 // pred_check_branch
          %356 = sbr.rel (%p354) target = $region56
        $region55: #{tpu_custom_call.1} parent=51 // pred_region
          %358 = dma.done %s350, 512
        $region56: #{tpu_custom_call.1} parent=51 // pred_fallthru
          _
        %s359 = sand.u32 %s29, 1
        %s360 = scalar_lea.sflag [#allocation6], %s359
        %s361 = sand.u32 %s63, 1
        %s362 = smul.addr %s361, 32
        %s363 = scalar_lea.vmem [#allocation5], %s362
        // Predicated region
        $region57: #{tpu_custom_call.1} parent=51 // pred_check
          %p364 = pneg %p76
        $region58: #{tpu_custom_call.1} parent=51 // pred_check_branch
          %366 = sbr.rel (%p364) target = $region60
        $region59: #{tpu_custom_call.1} parent=51 // pred_region
          %368 = dma.done %s360, 512
        $region60: #{tpu_custom_call.1} parent=51 // pred_fallthru
          _
        // Predicated region
        $region61: #{tpu_custom_call.1} parent=51 // pred_check
          %p369 = pneg %p97
        $region62: #{tpu_custom_call.1} parent=51 // pred_check_branch
          %371 = sbr.rel (%p369) target = $region64
        $region63: #{tpu_custom_call.1} parent=51 // pred_region
          %373 = dma.done [#allocation6], 1024
        $region64: #{tpu_custom_call.1} parent=51 // pred_fallthru
          _
        // Predicated region
        $region65: #{tpu_custom_call.1} parent=51 // pred_check
          %p374 = pneg %p139
        $region66: #{tpu_custom_call.1} parent=51 // pred_check_branch
          %376 = sbr.rel (%p374) target = $region68
        $region67: #{tpu_custom_call.1} parent=51 // pred_region
          %378 = dma.done [#allocation9], 1024
        $region68: #{tpu_custom_call.1} parent=51 // pred_fallthru
          _
        // Predicated region
        $region69: #{tpu_custom_call.1} parent=51 // pred_check
          %p379 = pneg %p181
        $region70: #{tpu_custom_call.1} parent=51 // pred_check_branch
          %381 = sbr.rel (%p379) target = $region72
        $region71: #{tpu_custom_call.1} parent=51 // pred_region
          %383 = dma.done [#allocation9], 1024
        $region72: #{tpu_custom_call.1} parent=51 // pred_fallthru
          _
        %s384 = sand.u32 %s37, 1
        %s385 = scalar_lea.sflag [#allocation3], %s384
        %s386 = sand.u32 %s37, 1
        %s387 = smul.addr %s386, 32
        %s388 = scalar_lea.vmem [#allocation2], %s387
        %p389 = pneg %p50
        %p390 = pneg %p47
        %s391 = sand.u32 %s29, 1
        %s392 = scalar_lea.sflag [#allocation6], %s391
        %s393 = sand.u32 %s63, 1
        %s394 = smul.addr %s393, 32
        %s395 = scalar_lea.vmem [#allocation5], %s394
        %p396 = pneg %p76
        %p397 = pneg %p73
        %p398 = pneg %p97
        %p399 = pneg %p94
        %p400 = pneg %p118
        %p401 = pneg %p115
        %p402 = pneg %p139
        %p403 = pneg %p136
        %p404 = pneg %p160
        %p405 = pneg %p157
        %p406 = pneg %p181
        %p407 = pneg %p178
        %p408 = pneg %p202
        %p409 = pneg %p199
        %p410 = pneg %p228
        %p411 = pneg %p225
        %s412 = sand.u32 %s215, 1
        %s413 = scalar_lea.sflag [#allocation4], %s412
        %s414 = sand.u32 %s215, 1
        %s415 = smul.addr %s414, 64
        %s416 = scalar_lea.vmem [#allocation11], %s415
        %v418 = vld [vmem:[%s363] sm:$0xf]
        %v419 = vld [vmem:[%s363 + $0x4] sm:$0xf]
        %v420 = vld [vmem:[%s363 + $0x8] sm:$0xf]
        %v421 = vld [vmem:[%s363 + $0xc] sm:$0xf]
        %v422 = vld [vmem:[%s363 + $0x10] sm:$0xf]
        %v423 = vld [vmem:[%s363 + $0x14] sm:$0xf]
        %v424 = vld [vmem:[%s363 + $0x18] sm:$0xf]
        %v425 = vld [vmem:[%s363 + $0x1c] sm:$0xf]
        %v426 = vld [vmem:[%s353] sm:$0xf]
        %v427 = vld [vmem:[%s353 + $0x4] sm:$0xf]
        %v428 = vld [vmem:[%s353 + $0x8] sm:$0xf]
        %v429 = vld [vmem:[%s353 + $0xc] sm:$0xf]
        %v430 = vld [vmem:[%s353 + $0x10] sm:$0xf]
        %v431 = vld [vmem:[%s353 + $0x14] sm:$0xf]
        %v432 = vld [vmem:[%s353 + $0x18] sm:$0xf]
        %v433 = vld [vmem:[%s353 + $0x1c] sm:$0xf]
        %v434 = vld [vmem:[#allocation7] sm:$0xf]
        %v435 = vld [vmem:[#allocation7 + $0x4] sm:$0xf]
        %v436 = vld [vmem:[#allocation7 + $0x8] sm:$0xf]
        %v437 = vld [vmem:[#allocation7 + $0xc] sm:$0xf]
        %v438 = vld [vmem:[#allocation7 + $0x10] sm:$0xf]
        %v439 = vld [vmem:[#allocation7 + $0x14] sm:$0xf]
        %v440 = vld [vmem:[#allocation7 + $0x18] sm:$0xf]
        %v441 = vld [vmem:[#allocation7 + $0x1c] sm:$0xf]
        %v442 = vld [vmem:[#allocation7 + $0x20] sm:$0xf]
        %v443 = vld [vmem:[#allocation7 + $0x24] sm:$0xf]
        %v444 = vld [vmem:[#allocation7 + $0x28] sm:$0xf]
        %v445 = vld [vmem:[#allocation7 + $0x2c] sm:$0xf]
        %v446 = vld [vmem:[#allocation7 + $0x30] sm:$0xf]
        %v447 = vld [vmem:[#allocation7 + $0x34] sm:$0xf]
        %v448 = vld [vmem:[#allocation7 + $0x38] sm:$0xf]
        %v449 = vld [vmem:[#allocation7 + $0x3c] sm:$0xf]
        %v450 = vld [vmem:[%s3] sm:$0x1]
        %v452 = vperm.slane %v450, 0
        %v462 = vunpack.c.l.b16 %v426
        %v463 = vunpack.c.l.b16 %v427
        %v464 = vunpack.c.l.b16 %v428
        %v465 = vunpack.c.l.b16 %v429
        %v466 = vunpack.c.l.b16 %v430
        %v467 = vunpack.c.l.b16 %v431
        %v468 = vunpack.c.l.b16 %v432
        %v469 = vunpack.c.l.b16 %v433
        %v470 = vpack.c.b16 %v463, %v462
        %v471 = vpack.c.b16 %v465, %v464
        %v472 = vpack.c.b16 %v467, %v466
        %v473 = vpack.c.b16 %v469, %v468
        %v494 = vunpack.c.l.b16 %v434
        %v495 = vunpack.c.l.b16 %v435
        %v496 = vunpack.c.l.b16 %v436
        %v497 = vunpack.c.l.b16 %v437
        %v498 = vunpack.c.l.b16 %v438
        %v499 = vunpack.c.l.b16 %v439
        %v500 = vunpack.c.l.b16 %v440
        %v501 = vunpack.c.l.b16 %v441
        %v502 = vunpack.c.l.b16 %v442
        %v503 = vunpack.c.l.b16 %v443
        %v504 = vunpack.c.l.b16 %v444
        %v505 = vunpack.c.l.b16 %v445
        %v506 = vunpack.c.l.b16 %v446
        %v507 = vunpack.c.l.b16 %v447
        %v508 = vunpack.c.l.b16 %v448
        %v509 = vunpack.c.l.b16 %v449
        %v510 = vpack.c.b16 %v495, %v494
        %v511 = vpack.c.b16 %v497, %v496
        %v512 = vpack.c.b16 %v499, %v498
        %v513 = vpack.c.b16 %v501, %v500
        %v514 = vpack.c.b16 %v503, %v502
        %v515 = vpack.c.b16 %v505, %v504
        %v516 = vpack.c.b16 %v507, %v506
        %v517 = vpack.c.b16 %v509, %v508
        %526 = vmatpush.bf16.msra.mxu0 %v517
        %527 = vmatpush.bf16.msra.mxu0 %v516
        %528 = vmatpush.bf16.msra.mxu0 %v515
        %529 = vmatpush.bf16.msra.mxu0 %v514
        %530 = vmatpush.bf16.msra.mxu0 %v513
        %531 = vmatpush.bf16.msra.mxu0 %v512
        %532 = vmatpush.bf16.msra.mxu0 %v511
        %533 = vmatpush.bf16.msra.mxu0 %v510
        %534 = vmatmul.bf16.gmra.mxu0 %v470
        %v535 = vpop.f32.mrf.mxu0
        %v536 = vadd.f32 %v452, %v535
        %v537 = vpop.f32.mrf.mxu0
        %v538 = vadd.f32 %v452, %v537
        %539 = vmatmul.bf16.gmra.mxu0 %v471
        %v540 = vpop.f32.mrf.mxu0
        %v541 = vadd.f32 %v452, %v540
        %v542 = vpop.f32.mrf.mxu0
        %v543 = vadd.f32 %v452, %v542
        %544 = vmatmul.bf16.gmra.mxu0 %v472
        %v545 = vpop.f32.mrf.mxu0
        %v546 = vadd.f32 %v452, %v545
        %v547 = vpop.f32.mrf.mxu0
        %v548 = vadd.f32 %v452, %v547
        %549 = vmatmul.bf16.gmra.mxu0 %v473
        %v550 = vpop.f32.mrf.mxu0
        %v551 = vadd.f32 %v452, %v550
        %v552 = vpop.f32.mrf.mxu0
        %v553 = vadd.f32 %v452, %v552
        %554 = vdwg.mxu0
        %v555 = vmax.f32 %v536, 0.0
        %v556 = vmax.f32 %v538, 0.0
        %v557 = vmax.f32 %v541, 0.0
        %v558 = vmax.f32 %v543, 0.0
        %v559 = vmax.f32 %v546, 0.0
        %v560 = vmax.f32 %v548, 0.0
        %v561 = vmax.f32 %v551, 0.0
        %v562 = vmax.f32 %v553, 0.0
        %v563 = vpack.c.bf16 %v556, %v555
        %v564 = vpack.c.bf16 %v558, %v557
        %v565 = vpack.c.bf16 %v560, %v559
        %v566 = vpack.c.bf16 %v562, %v561
        %v567 = vld [vmem:[#allocation8] sm:$0xf]
        %v568 = vld [vmem:[#allocation8 + $0x4] sm:$0xf]
        %v569 = vld [vmem:[#allocation8 + $0x8] sm:$0xf]
        %v570 = vld [vmem:[#allocation8 + $0xc] sm:$0xf]
        %v571 = vld [vmem:[#allocation8 + $0x10] sm:$0xf]
        %v572 = vld [vmem:[#allocation8 + $0x14] sm:$0xf]
        %v573 = vld [vmem:[#allocation8 + $0x18] sm:$0xf]
        %v574 = vld [vmem:[#allocation8 + $0x1c] sm:$0xf]
        %v575 = vld [vmem:[#allocation8 + $0x20] sm:$0xf]
        %v576 = vld [vmem:[#allocation8 + $0x24] sm:$0xf]
        %v577 = vld [vmem:[#allocation8 + $0x28] sm:$0xf]
        %v578 = vld [vmem:[#allocation8 + $0x2c] sm:$0xf]
        %v579 = vld [vmem:[#allocation8 + $0x30] sm:$0xf]
        %v580 = vld [vmem:[#allocation8 + $0x34] sm:$0xf]
        %v581 = vld [vmem:[#allocation8 + $0x38] sm:$0xf]
        %v582 = vld [vmem:[#allocation8 + $0x3c] sm:$0xf]
        %v599 = vunpack.c.l.b16 %v567
        %v600 = vunpack.c.l.b16 %v568
        %v601 = vunpack.c.l.b16 %v569
        %v602 = vunpack.c.l.b16 %v570
        %v603 = vunpack.c.l.b16 %v571
        %v604 = vunpack.c.l.b16 %v572
        %v605 = vunpack.c.l.b16 %v573
        %v606 = vunpack.c.l.b16 %v574
        %v607 = vunpack.c.l.b16 %v575
        %v608 = vunpack.c.l.b16 %v576
        %v609 = vunpack.c.l.b16 %v577
        %v610 = vunpack.c.l.b16 %v578
        %v611 = vunpack.c.l.b16 %v579
        %v612 = vunpack.c.l.b16 %v580
        %v613 = vunpack.c.l.b16 %v581
        %v614 = vunpack.c.l.b16 %v582
        %v615 = vpack.c.b16 %v600, %v599
        %v616 = vpack.c.b16 %v602, %v601
        %v617 = vpack.c.b16 %v604, %v603
        %v618 = vpack.c.b16 %v606, %v605
        %v619 = vpack.c.b16 %v608, %v607
        %v620 = vpack.c.b16 %v610, %v609
        %v621 = vpack.c.b16 %v612, %v611
        %v622 = vpack.c.b16 %v614, %v613
        %631 = vmatpush.bf16.msra.mxu0 %v622
        %632 = vmatpush.bf16.msra.mxu0 %v621
        %633 = vmatpush.bf16.msra.mxu0 %v620
        %634 = vmatpush.bf16.msra.mxu0 %v619
        %635 = vmatpush.bf16.msra.mxu0 %v618
        %636 = vmatpush.bf16.msra.mxu0 %v617
        %637 = vmatpush.bf16.msra.mxu0 %v616
        %638 = vmatpush.bf16.msra.mxu0 %v615
        %639 = vmatmul.bf16.gmra.mxu0 %v563
        %v640 = vpop.f32.mrf.mxu0
        %v641 = vadd.f32 0.0, %v640
        %v642 = vpop.f32.mrf.mxu0
        %v643 = vadd.f32 0.0, %v642
        %644 = vmatmul.bf16.gmra.mxu0 %v564
        %v645 = vpop.f32.mrf.mxu0
        %v646 = vadd.f32 0.0, %v645
        %v647 = vpop.f32.mrf.mxu0
        %v648 = vadd.f32 0.0, %v647
        %649 = vmatmul.bf16.gmra.mxu0 %v565
        %v650 = vpop.f32.mrf.mxu0
        %v651 = vadd.f32 0.0, %v650
        %v652 = vpop.f32.mrf.mxu0
        %v653 = vadd.f32 0.0, %v652
        %654 = vmatmul.bf16.gmra.mxu0 %v566
        %v655 = vpop.f32.mrf.mxu0
        %v656 = vadd.f32 0.0, %v655
        %v657 = vpop.f32.mrf.mxu0
        %v658 = vadd.f32 0.0, %v657
        %659 = vdwg.mxu0
        %v660 = vpack.c.bf16 %v643, %v641
        %v661 = vpack.c.bf16 %v648, %v646
        %v662 = vpack.c.bf16 %v653, %v651
        %v663 = vpack.c.bf16 %v658, %v656
        %v664 = vld [vmem:[%s5] sm:$0x1]
        %v666 = vperm.slane %v664, 0
        %v676 = vunpack.c.l.b16 %v418
        %v677 = vunpack.c.l.b16 %v419
        %v678 = vunpack.c.l.b16 %v420
        %v679 = vunpack.c.l.b16 %v421
        %v680 = vunpack.c.l.b16 %v422
        %v681 = vunpack.c.l.b16 %v423
        %v682 = vunpack.c.l.b16 %v424
        %v683 = vunpack.c.l.b16 %v425
        %v684 = vpack.c.b16 %v677, %v676
        %v685 = vpack.c.b16 %v679, %v678
        %v686 = vpack.c.b16 %v681, %v680
        %v687 = vpack.c.b16 %v683, %v682
        %vm688 = vcmask 523264
        %v690 = vsel %vm688, %v684, 0
        %v693 = vsel %vm688, %v685, 0
        %v696 = vsel %vm688, %v686, 0
        %v699 = vsel %vm688, %v687, 0
        %701 = vmatpush.bf16.msra.mxu0 0
        %702 = vmatpush.bf16.msra.mxu0 0
        %703 = vmatpush.bf16.msra.mxu0 0
        %704 = vmatpush.bf16.msra.mxu0 0
        %705 = vmatpush.bf16.msra.mxu0 %v663
        %706 = vmatpush.bf16.msra.mxu0 %v662
        %707 = vmatpush.bf16.msra.mxu0 %v661
        %708 = vmatpush.bf16.msra.mxu0 %v660
        %709 = vmatmul.bf16.gmra.mxu0 %v690
        %v710 = vpop.f32.mrf.mxu0
        %v711 = vadd.f32 %v666, %v710
        %v712 = vpop.f32.mrf.mxu0
        %v713 = vadd.f32 %v666, %v712
        %714 = vmatmul.bf16.gmra.mxu0 %v693
        %v715 = vpop.f32.mrf.mxu0
        %v716 = vadd.f32 %v666, %v715
        %v717 = vpop.f32.mrf.mxu0
        %v718 = vadd.f32 %v666, %v717
        %719 = vmatmul.bf16.gmra.mxu0 %v696
        %v720 = vpop.f32.mrf.mxu0
        %v721 = vadd.f32 %v666, %v720
        %v722 = vpop.f32.mrf.mxu0
        %v723 = vadd.f32 %v666, %v722
        %724 = vmatmul.bf16.gmra.mxu0 %v699
        %v725 = vpop.f32.mrf.mxu0
        %v726 = vadd.f32 %v666, %v725
        %v727 = vpop.f32.mrf.mxu0
        %v728 = vadd.f32 %v666, %v727
        %729 = vdwg.mxu0
        %v730 = vmax.f32 %v711, 0.0
        %v731 = vmax.f32 %v713, 0.0
        %v732 = vmax.f32 %v716, 0.0
        %v733 = vmax.f32 %v718, 0.0
        %v734 = vmax.f32 %v721, 0.0
        %v735 = vmax.f32 %v723, 0.0
        %v736 = vmax.f32 %v726, 0.0
        %v737 = vmax.f32 %v728, 0.0
        %v738 = vpack.c.bf16 %v731, %v730
        %v739 = vpack.c.bf16 %v733, %v732
        %v740 = vpack.c.bf16 %v735, %v734
        %v741 = vpack.c.bf16 %v737, %v736
        %v742 = vld [vmem:[#allocation10] sm:$0xf]
        %v743 = vld [vmem:[#allocation10 + $0x4] sm:$0xf]
        %v744 = vld [vmem:[#allocation10 + $0x8] sm:$0xf]
        %v745 = vld [vmem:[#allocation10 + $0xc] sm:$0xf]
        %v746 = vld [vmem:[#allocation10 + $0x10] sm:$0xf]
        %v747 = vld [vmem:[#allocation10 + $0x14] sm:$0xf]
        %v748 = vld [vmem:[#allocation10 + $0x18] sm:$0xf]
        %v749 = vld [vmem:[#allocation10 + $0x1c] sm:$0xf]
        %v750 = vld [vmem:[#allocation10 + $0x20] sm:$0xf]
        %v751 = vld [vmem:[#allocation10 + $0x24] sm:$0xf]
        %v752 = vld [vmem:[#allocation10 + $0x28] sm:$0xf]
        %v753 = vld [vmem:[#allocation10 + $0x2c] sm:$0xf]
        %v754 = vld [vmem:[#allocation10 + $0x30] sm:$0xf]
        %v755 = vld [vmem:[#allocation10 + $0x34] sm:$0xf]
        %v756 = vld [vmem:[#allocation10 + $0x38] sm:$0xf]
        %v757 = vld [vmem:[#allocation10 + $0x3c] sm:$0xf]
        %v774 = vunpack.c.l.b16 %v742
        %v775 = vunpack.c.l.b16 %v743
        %v776 = vunpack.c.l.b16 %v744
        %v777 = vunpack.c.l.b16 %v745
        %v778 = vunpack.c.l.b16 %v746
        %v779 = vunpack.c.l.b16 %v747
        %v780 = vunpack.c.l.b16 %v748
        %v781 = vunpack.c.l.b16 %v749
        %v782 = vunpack.c.l.b16 %v750
        %v783 = vunpack.c.l.b16 %v751
        %v784 = vunpack.c.l.b16 %v752
        %v785 = vunpack.c.l.b16 %v753
        %v786 = vunpack.c.l.b16 %v754
        %v787 = vunpack.c.l.b16 %v755
        %v788 = vunpack.c.l.b16 %v756
        %v789 = vunpack.c.l.b16 %v757
        %v790 = vpack.c.b16 %v775, %v774
        %v791 = vpack.c.b16 %v777, %v776
        %v792 = vpack.c.b16 %v779, %v778
        %v793 = vpack.c.b16 %v781, %v780
        %v794 = vpack.c.b16 %v783, %v782
        %v795 = vpack.c.b16 %v785, %v784
        %v796 = vpack.c.b16 %v787, %v786
        %v797 = vpack.c.b16 %v789, %v788
        %806 = vmatpush.bf16.msra.mxu0 %v797
        %807 = vmatpush.bf16.msra.mxu0 %v796
        %808 = vmatpush.bf16.msra.mxu0 %v795
        %809 = vmatpush.bf16.msra.mxu0 %v794
        %810 = vmatpush.bf16.msra.mxu0 %v793
        %811 = vmatpush.bf16.msra.mxu0 %v792
        %812 = vmatpush.bf16.msra.mxu0 %v791
        %813 = vmatpush.bf16.msra.mxu0 %v790
        %814 = vmatmul.bf16.gmra.mxu0 %v738
        %v815 = vpop.f32.mrf.mxu0
        %v816 = vadd.f32 0.0, %v815
        %v817 = vpop.f32.mrf.mxu0
        %v818 = vadd.f32 0.0, %v817
        %819 = vmatmul.bf16.gmra.mxu0 %v739
        %v820 = vpop.f32.mrf.mxu0
        %v821 = vadd.f32 0.0, %v820
        %v822 = vpop.f32.mrf.mxu0
        %v823 = vadd.f32 0.0, %v822
        %824 = vmatmul.bf16.gmra.mxu0 %v740
        %v825 = vpop.f32.mrf.mxu0
        %v826 = vadd.f32 0.0, %v825
        %v827 = vpop.f32.mrf.mxu0
        %v828 = vadd.f32 0.0, %v827
        %829 = vmatmul.bf16.gmra.mxu0 %v741
        %v830 = vpop.f32.mrf.mxu0
        %v831 = vadd.f32 0.0, %v830
        %v832 = vpop.f32.mrf.mxu0
        %v833 = vadd.f32 0.0, %v832
        %834 = vdwg.mxu0
        %v835 = vpack.c.bf16 %v818, %v816
        %v836 = vpack.c.bf16 %v823, %v821
        %v837 = vpack.c.bf16 %v828, %v826
        %v838 = vpack.c.bf16 %v833, %v831
        %v839 = vld [vmem:[%s7] sm:$0x1]
        %v841 = vperm.slane %v839, 0
        %843 = vmatpush.bf16.msra.mxu0 0
        %844 = vmatpush.bf16.msra.mxu0 0
        %845 = vmatpush.bf16.msra.mxu0 0
        %846 = vmatpush.bf16.msra.mxu0 0
        %847 = vmatpush.bf16.msra.mxu0 %v838
        %848 = vmatpush.bf16.msra.mxu0 %v837
        %849 = vmatpush.bf16.msra.mxu0 %v836
        %850 = vmatpush.bf16.msra.mxu0 %v835
        %851 = vmatmul.bf16.gmra.mxu0 %v690
        %v852 = vpop.f32.mrf.mxu0
        %v853 = vadd.f32 %v841, %v852
        %v854 = vpop.f32.mrf.mxu0
        %v855 = vadd.f32 %v841, %v854
        %856 = vmatmul.bf16.gmra.mxu0 %v693
        %v857 = vpop.f32.mrf.mxu0
        %v858 = vadd.f32 %v841, %v857
        %v859 = vpop.f32.mrf.mxu0
        %v860 = vadd.f32 %v841, %v859
        %861 = vmatmul.bf16.gmra.mxu0 %v696
        %v862 = vpop.f32.mrf.mxu0
        %v863 = vadd.f32 %v841, %v862
        %v864 = vpop.f32.mrf.mxu0
        %v865 = vadd.f32 %v841, %v864
        %866 = vmatmul.bf16.gmra.mxu0 %v699
        %v867 = vpop.f32.mrf.mxu0
        %v868 = vadd.f32 %v841, %v867
        %v869 = vpop.f32.mrf.mxu0
        %v870 = vadd.f32 %v841, %v869
        %871 = vdwg.mxu0
        %872 = vst [vmem:[%s416] sm:$0xff] %v853
        %873 = vst [vmem:[%s416 + $0x8] sm:$0xff] %v855
        %874 = vst [vmem:[%s416 + $0x10] sm:$0xff] %v858
        %875 = vst [vmem:[%s416 + $0x18] sm:$0xff] %v860
        %876 = vst [vmem:[%s416 + $0x20] sm:$0xff] %v863
        %877 = vst [vmem:[%s416 + $0x28] sm:$0xff] %v865
        %878 = vst [vmem:[%s416 + $0x30] sm:$0xff] %v868
        %879 = vst [vmem:[%s416 + $0x38] sm:$0xff] %v870
        %s880 = sand.u32 %s215, 1
        %s881 = scalar_lea.sflag [#allocation4], %s880
        %s882 = sand.u32 %s215, 1
        %s883 = smul.addr %s882, 64
        %s884 = scalar_lea.vmem [#allocation11], %s883
        // Predicated region
        $region73: #{tpu_custom_call.1} parent=51 // pred_check
          %p885 = pneg %p225
        $region74: #{tpu_custom_call.1} parent=51 // pred_check_branch
          %887 = sbr.rel (%p885) target = $region76
        $region75: #{tpu_custom_call.1} parent=51 // pred_region
          %889 = vsyncadd %s881, 0
          %s890 = smul.addr %s29, 8
          %s891 = smul.addr %s890, 8
          %s892 = scalar_lea.hbm %s8, %s891
          %s893 = sshll.u32 %s884, 4
          %s894 = int_to_ptr.vmem [resolvable:$true] %s893
          %s895 = sshll.u32 %s892, 4
          %s896 = int_to_ptr.hbm [resolvable:$true] %s895
          %901 = dma.vmem_to_hbm [thread:$0]  %s894, 1024, %s896, %s881, 128, 128, 8
        $region76: #{tpu_custom_call.1} parent=51 // pred_fallthru
          _
      $region52: #{tpu_custom_call.1} parent=5 // pred_fallthru
        _
      %p902 = scmp.le.s32.totalorder 2, %s24
      // Predicated region
      $region77: #{tpu_custom_call.1} parent=5 // pred_check
        %p903 = pneg %p902
      $region78: #{tpu_custom_call.1} parent=5 // pred_check_branch
        %905 = sbr.rel (%p903) target = $region80
      $region79: #{tpu_custom_call.1} parent=5 // pred_region
        %s906 = ssub.s32 %s24, 2
        // Predicated region
        $region81: #{tpu_custom_call.1} parent=79 // pred_check
          %p907 = pneg %p231
        $region82: #{tpu_custom_call.1} parent=79 // pred_check_branch
          %909 = sbr.rel (%p907) target = $region84
        $region83: #{tpu_custom_call.1} parent=79 // pred_region
          %s910 = sand.u32 %s216, 1
          %s911 = scalar_lea.sflag [#allocation4], %s910
          %s912 = sand.u32 %s216, 1
          %s913 = smul.addr %s912, 64
          %s914 = scalar_lea.vmem [#allocation11], %s913
          %916 = dma.done %s911, 1024
        $region84: #{tpu_custom_call.1} parent=79 // pred_fallthru
          _
      $region80: #{tpu_custom_call.1} parent=5 // pred_fallthru
        _
    $region6: #{tpu_custom_call.1} parent=1 // loop_footer
      %s28 = sadd.s32 1, %s24
    $region7: #{tpu_custom_call.1} parent=1 // loop_footer_branch
      %23 = sbr.rel target = $region3
    $region8: #{tpu_custom_call.1} parent=1 // loop_exit
      _
    %917 = vsyncpa [#allocation3], 1
    %s918 = scalar_lea.sflag [#allocation3], 1
    %919 = vsyncpa %s918, 1
    %920 = vsyncpa [#allocation6], 1
    %s921 = scalar_lea.sflag [#allocation6], 1
    %922 = vsyncpa %s921, 1
    %923 = vsyncpa [#allocation9], 1
    %924 = vsyncpa [#allocation4], 1
    %s925 = scalar_lea.sflag [#allocation4], 1
    %926 = vsyncpa %s925, 1

</llo_original>
